<compile_context>
chip_gen: v6e
topology: v6e:2x2x1
jax: 0.10.0
libtpu: 0.0.40
codegen_flags: <defaults>
</compile_context>

<pallas_src>
import jax
import jax.numpy as jnp
from jax.experimental import pallas as pl
from jax.experimental.pallas import tpu as pltpu


def _round_up(x, m):
    return ((x + m - 1) // m) * m


# ---------------------------------------------------------------------------
# Kernels
# ---------------------------------------------------------------------------
def gcn_kernel_single_k(x_ref, w_ref, o_ref):
    # x_ref: (tile_n, in_feats) f32  -- cast to bf16 in-kernel (no extra HBM pass)
    # w_ref: (in_feats, out_pad) bf16 -- constant block every grid step
    # o_ref: (tile_n, out_pad)  bf16 -- lane-dense (out_pad % 128 == 0), unmasked stores
    h = jnp.dot(x_ref[...].astype(jnp.bfloat16), w_ref[...],
                preferred_element_type=jnp.float32)
    o_ref[...] = jnp.maximum(h, 0.0).astype(o_ref.dtype)  # ReLU on the f32 accumulator


def gcn_kernel_k_tiled(x_ref, w_ref, o_ref, acc_ref):
    # Reduction over in_feats split across the last ("arbitrary") grid axis,
    # accumulated in an f32 VMEM scratch; ReLU + bf16 store on the last step.
    k = pl.program_id(1)

    @pl.when(k == 0)
    def _():
        acc_ref[...] = jnp.zeros_like(acc_ref)

    acc_ref[...] += jnp.dot(x_ref[...].astype(jnp.bfloat16), w_ref[...],
                            preferred_element_type=jnp.float32)

    @pl.when(k == pl.num_programs(1) - 1)
    def _():
        o_ref[...] = jnp.maximum(acc_ref[...], 0.0).astype(o_ref.dtype)


# ---------------------------------------------------------------------------
# Wrapper
# ---------------------------------------------------------------------------
def gcn_forward(feature, weight_t, *, out_dtype=jnp.bfloat16,
                tile_n_max=1024, tile_k_max=2048,
                vmem_budget_bytes=40 << 20, trim_output=True):
    """feature: [N, in_feats] f32; weight_t: [in_feats, out_feats] f32 (W.T layout)."""
    N, in_feats = feature.shape
    k_dim, out_feats = weight_t.shape
    assert k_dim == in_feats

    # ---- static layout decisions --------------------------------------------
    out_pad = _round_up(out_feats, 128)                 # lane-dense output slab
    out_bytes = jnp.dtype(out_dtype).itemsize

    # K (in_feats) tiling: single block when small; otherwise pick a
    # multiple-of-128 divisor so the feature matrix never needs K padding.
    if in_feats <= tile_k_max:
        tile_k = in_feats
    else:
        tile_k = in_feats                               # fallback: one big K block
        for cand in range(tile_k_max - tile_k_max % 128, 0, -128):
            if in_feats % cand == 0:
                tile_k = cand
                break
        # TODO(synk): huge in_feats with no multiple-of-128 divisor falls back
        # to a single K block (larger VMEM footprint but still correct).
    k_blocks = in_feats // tile_k

    # Node tile: aim for >= 4 grid steps (both v7x TensorCores busy), cap at
    # tile_n_max, then shrink until the double-buffered footprint fits VMEM.
    tile_n = min(tile_n_max, max(8, _round_up((N + 3) // 4, 8)))

    def footprint(tn):
        f = 2 * tn * tile_k * 4                          # x tile (f32), double-buffered
        f += 2 * tile_k * out_pad * 2                    # weight tile (bf16), double-buffered
        f += 2 * tn * out_pad * out_bytes                # output tile, double-buffered
        if k_blocks > 1:
            f += tn * out_pad * 4                        # f32 accumulator scratch
        return f

    while footprint(tile_n) > vmem_budget_bytes and tile_n > 8:
        tile_n = max(8, _round_up(tile_n // 2, 8))

    n_pad = _round_up(N, tile_n)
    n_blocks = n_pad // tile_n

    # ---- operands -------------------------------------------------------------
    # Features stay f32 in HBM (bf16 cast happens in-kernel -> no extra HBM pass).
    x = feature
    if n_pad != N:
        # Only taken when tile_n doesn't divide N (ragged node count); zero rows
        # give zero outputs and are trimmed below.
        x = jnp.pad(x, ((0, n_pad - N), (0, 0)))
    # Weight is tiny: cast/pad it in the wrapper (zero cols -> zero outputs).
    w = weight_t.astype(jnp.bfloat16)
    if out_pad != out_feats:
        w = jnp.pad(w, ((0, 0), (0, out_pad - out_feats)))

    if k_blocks == 1:
        grid = (n_blocks,)
        in_specs = [
            pl.BlockSpec((tile_n, tile_k), lambda i: (i, 0)),
            # Constant block -> never re-DMAed.  (pipeline_mode=pl.Buffered(1)
            # would reclaim its second VMEM buffer; footprint() budgets for 2x.)
            pl.BlockSpec((tile_k, out_pad), lambda i: (0, 0)),
        ]
        out_specs = pl.BlockSpec((tile_n, out_pad), lambda i: (i, 0))
        scratch_shapes = ()
        kernel = gcn_kernel_single_k
        dim_sem = ("parallel",)
    else:
        grid = (n_blocks, k_blocks)                      # reduction axis last
        in_specs = [
            pl.BlockSpec((tile_n, tile_k), lambda i, k: (i, k)),
            pl.BlockSpec((tile_k, out_pad), lambda i, k: (k, 0)),
        ]
        out_specs = pl.BlockSpec((tile_n, out_pad), lambda i, k: (i, 0))
        scratch_shapes = (pltpu.VMEM((tile_n, out_pad), jnp.float32),)
        kernel = gcn_kernel_k_tiled
        dim_sem = ("parallel", "arbitrary")

    vmem_limit = int(min(56 << 20, max(16 << 20, footprint(tile_n) + (4 << 20))))

    out = pl.pallas_call(
        kernel,
        out_shape=jax.ShapeDtypeStruct((n_pad, out_pad), out_dtype),
        grid_spec=pltpu.PrefetchScalarGridSpec(
            num_scalar_prefetch=0,
            grid=grid,
            in_specs=in_specs,
            out_specs=out_specs,
            scratch_shapes=scratch_shapes,
        ),
        compiler_params=pltpu.CompilerParams(
            dimension_semantics=dim_sem,     # node axis shards across TCs on v7x
            vmem_limit_bytes=vmem_limit,
        ),
    )(x, w)

    if trim_output and (n_pad != N or out_pad != out_feats):
        # Chained consumers can pass trim_output=False to keep the padded
        # (n_pad, out_pad) slab and skip this extra HBM slice-copy.
        out = out[:N, :out_feats]
    return out


if __name__ == "__main__":
    # Small shapes consistent with the module: N nodes, in_feats -> out_feats.
    N, in_feats, out_feats = 256, 32, 64

    key = jax.random.PRNGKey(0)
    k_feat, k_w = jax.random.split(key)

    feature = jax.random.normal(k_feat, (N, in_feats), dtype=jnp.float32)

    # nn.Linear(in_feats, out_feats, bias=False): PyTorch stores W as
    # [out_feats, in_feats]; we pass W.T ([in_feats, out_feats]) to the kernel.
    bound = 1.0 / (in_feats ** 0.5)
    w_torch_layout = jax.random.uniform(
        k_w, (out_feats, in_feats), dtype=jnp.float32, minval=-bound, maxval=bound
    )
    weight_t = w_torch_layout.T  # [in_feats, out_feats]

    out = jax.block_until_ready(gcn_forward(feature, weight_t))
    assert out.shape == (N, out_feats)
    assert out.dtype == jnp.bfloat16

    out_f32 = out.astype(jnp.float32)

    # Reference 1: same bf16-input / f32-accumulate / bf16-output pipeline
    # (tight check that the kernel math matches).
    ref_bf16 = jnp.maximum(
        jnp.dot(feature.astype(jnp.bfloat16), weight_t.astype(jnp.bfloat16),
                preferred_element_type=jnp.float32),
        0.0,
    ).astype(jnp.bfloat16).astype(jnp.float32)
    assert jnp.allclose(out_f32, ref_bf16, atol=1e-3, rtol=1e-2)

    # Reference 2: full-f32 PyTorch-equivalent forward (looser: covers the
    # bf16 matmul + bf16 output quantization adopted for HBM bandwidth).
    ref_f32 = jnp.maximum(feature @ weight_t, 0.0)
    assert jnp.allclose(out_f32, ref_f32, atol=3e-2, rtol=3e-2)

    print("KERNEL_OK")
</pallas_src>

<mosaic_0001>
module attributes {stable_mosaic.version = 11 : i64} {
  func.func @gcn_kernel_single_k(%arg0: i32, %arg1: memref<64x32xf32, #tpu.memory_space<vmem>>, %arg2: memref<32x128xbf16, #tpu.memory_space<vmem>>, %arg3: memref<64x128xbf16, #tpu.memory_space<vmem>>) attributes {dimension_semantics = [#tpu.dimension_semantics<parallel>], iteration_bounds = array<i64: 4>, scalar_prefetch = 0 : i64, scratch_operands = 0 : i64, tpu.core_type = #tpu.core_type<tc>, window_params = [{transform_indices = @transform_0, window_bounds = array<i64: 64, 32>}, {pipeline_mode = #tpu.pipeline_mode<synchronous>, transform_indices = @transform_1, window_bounds = array<i64: 32, 128>}, {transform_indices = @transform_2, window_bounds = array<i64: 64, 128>}]} {
    %c0 = arith.constant 0 : index
    %c0_0 = arith.constant 0 : index
    %0 = vector.load %arg1[%c0, %c0_0] : memref<64x32xf32, #tpu.memory_space<vmem>>, vector<64x32xf32>
    %1 = arith.truncf %0 : vector<64x32xf32> to vector<64x32xbf16>
    %c0_1 = arith.constant 0 : index
    %c0_2 = arith.constant 0 : index
    %2 = vector.load %arg2[%c0_1, %c0_2] : memref<32x128xbf16, #tpu.memory_space<vmem>>, vector<32x128xbf16>
    %cst = arith.constant dense<0.000000e+00> : vector<64x128xf32>
    %3 = tpu.matmul %1, %2, %cst {dimension_numbers = #tpu.dot_dimension_numbers<[1], [0], [0], [1], [0, 0, 1, 1], [], []>} : vector<64x32xbf16>, vector<32x128xbf16>, vector<64x128xf32> -> vector<64x128xf32>
    %cst_3 = arith.constant 0.000000e+00 : f32
    %4 = vector.broadcast %cst_3 : f32 to vector<64x128xf32>
    %5 = arith.maximumf %3, %4 : vector<64x128xf32>
    %6 = arith.truncf %5 : vector<64x128xf32> to vector<64x128xbf16>
    %c0_4 = arith.constant 0 : index
    %c0_5 = arith.constant 0 : index
    %7 = vector.load %arg3[%c0_4, %c0_5] : memref<64x128xbf16, #tpu.memory_space<vmem>>, vector<64x128xbf16>
    tpu.vector_store %arg3[%c0_4, %c0_5], %6 {strides = array<i32>} : memref<64x128xbf16, #tpu.memory_space<vmem>>, vector<64x128xbf16>,
    return
  }
  func.func @transform_0(%arg0: i32) -> (i32, i32) {
    %c0_i32 = arith.constant 0 : i32
    %c0_i32_0 = arith.constant 0 : i32
    return %arg0, %c0_i32 : i32, i32
  }
  func.func @transform_1(%arg0: i32) -> (i32, i32) {
    %c0_i32 = arith.constant 0 : i32
    %c0_i32_0 = arith.constant 0 : i32
    %c0_i32_1 = arith.constant 0 : i32
    return %c0_i32, %c0_i32_0 : i32, i32
  }
  func.func @transform_2(%arg0: i32) -> (i32, i32) {
    %c0_i32 = arith.constant 0 : i32
    %c0_i32_0 = arith.constant 0 : i32
    return %arg0, %c0_i32 : i32, i32
  }
}

</mosaic_0001>

<llo_original>
// kernel: tpu_custom_call.1
$region0: #{tpu_custom_call.1}
  #allocation0 [shape = 'u32[]', space=smem, size = 0x4, offset = 0x4, fixed_abs, tag = 'smem constant byte address 0x4 - core index']
  #allocation1 [shape = 'u32[144,128]{1,0:T(1,128)}', space=vmem, size = 0x12000, scoped, tag = 'internal scratch']
  %s0 = inlined_call_operand.vmem [shape: f32[256,32], index: 0, kind: input, shape index: {}]
  %s1 = inlined_call_operand.vmem [shape: bf16[32,128], index: 1, kind: input, shape index: {}]
  %s2 = inlined_call_operand.hbm [shape: bf16[256,128], index: 2, kind: output, shape index: {}]
  %s3 = sld [smem:[#allocation0]]
  $region41: #{tpu_custom_call.1} parent=0
    _
  %s5 = ssub.s32 1, %s3
  %s6 = scalar_select 0, %s5, %s3
  $region1: #{tpu_custom_call.1} parent=0
    #allocation2 [shape = 'u8[32768]{0}', space=vmem, size = 0x8000, scoped, tag = 'output window, operand 0']
    #allocation3 [shape = 's32[2]{0}', space=sflag, size = 0x8, scoped, tag = 'scoped memory for tpu_custom_call.1']
    %7 = vsyncpa [#allocation3], 0
    %s8 = scalar_lea.sflag [#allocation3], 1
    %9 = vsyncpa %s8, 0
    loop: start=0, step=1, limit=6
    $region2: #{tpu_custom_call.1} parent=1 // loop_pre_header
      _
    $region3: #{tpu_custom_call.1} parent=1 // loop_header
      %s11 = sphi 0, %s15
      %p12 = scmp.ge.s32.totalorder %s11, 6
      %s21 = sphi 0, %s23
      %s24 = sphi 0, %s21
      %s25 = sphi 0, %s24
      %s41 = sphi 0, %s25
      %s45 = sphi 0, %s45
      %s47 = sphi 0, %s45
      %s48 = sphi 0, %s47
      %s62 = sphi 0, %s48
      %s68 = sphi 0, %s70
      %s71 = sphi 0, %s68
      %s72 = sphi 0, %s71
      %s88 = sphi 0, %s72
    $region4: #{tpu_custom_call.1} parent=1 // loop_header_branch
      %14 = sbr.rel (%p12) target = $region8
    $region5: #{tpu_custom_call.1} parent=1 // loop_body
      %s16 = ssub.s32 %s11, 1
      %s17 = ssub.s32 %s11, 2
      %s18 = sadd.s32 %s11, 1
      %s19 = ssub.s32 %s11, %s18
      %p20 = scmp.eq.s32.totalorder %s19, 0
      %s22 = sadd.s32 %s21, 1
      %s23 = scalar_select %p20, %s21, %s22
      %p26 = pneg %p20
      %p27 = scmp.eq.s32.totalorder %s11, 3
      %p28 = por %p26, %p27
      %p29 = scmp.ne.s32.totalorder %s21, %s24
      %p30 = scmp.eq.s32.totalorder %s11, 0
      %p31 = por %p29, %p30
      %p32 = scmp.ne.s32.totalorder %s21, %s24
      %p33 = scmp.eq.s32.totalorder %s16, 3
      %p34 = por %p32, %p33
      %p35 = scmp.ne.s32.totalorder %s24, %s25
      %p36 = scmp.eq.s32.totalorder %s16, 0
      %p37 = por %p35, %p36
      %p38 = scmp.ne.s32.totalorder %s24, %s25
      %p39 = scmp.eq.s32.totalorder %s17, 3
      %p40 = por %p38, %p39
      %p42 = scmp.ne.s32.totalorder %s25, %s41
      %p43 = scmp.eq.s32.totalorder %s17, 0
      %p44 = por %p42, %p43
      %s46 = sadd.s32 %s45, 1
      %p49 = scmp.eq.s32.totalorder %s11, 3
      %p50 = scmp.ne.s32.totalorder %s45, %s47
      %p51 = scmp.eq.s32.totalorder %s11, 0
      %p52 = por %p50, %p51
      %p53 = scmp.ne.s32.totalorder %s45, %s47
      %p54 = scmp.eq.s32.totalorder %s16, 3
      %p55 = por %p53, %p54
      %p56 = scmp.ne.s32.totalorder %s47, %s48
      %p57 = scmp.eq.s32.totalorder %s16, 0
      %p58 = por %p56, %p57
      %p59 = scmp.ne.s32.totalorder %s47, %s48
      %p60 = scmp.eq.s32.totalorder %s17, 3
      %p61 = por %p59, %p60
      %p63 = scmp.ne.s32.totalorder %s48, %s62
      %p64 = scmp.eq.s32.totalorder %s17, 0
      %p65 = por %p63, %p64
      %s66 = ssub.s32 %s11, %s18
      %p67 = scmp.eq.s32.totalorder %s66, 0
      %s69 = sadd.s32 %s68, 1
      %s70 = scalar_select %p67, %s68, %s69
      %p73 = pneg %p67
      %p74 = scmp.eq.s32.totalorder %s11, 3
      %p75 = por %p73, %p74
      %p76 = scmp.ne.s32.totalorder %s68, %s71
      %p77 = scmp.eq.s32.totalorder %s11, 0
      %p78 = por %p76, %p77
      %p79 = scmp.ne.s32.totalorder %s68, %s71
      %p80 = scmp.eq.s32.totalorder %s16, 3
      %p81 = por %p79, %p80
      %p82 = scmp.ne.s32.totalorder %s71, %s72
      %p83 = scmp.eq.s32.totalorder %s16, 0
      %p84 = por %p82, %p83
      %p85 = scmp.ne.s32.totalorder %s71, %s72
      %p86 = scmp.eq.s32.totalorder %s17, 3
      %p87 = por %p85, %p86
      %p89 = scmp.ne.s32.totalorder %s72, %s88
      %p90 = scmp.eq.s32.totalorder %s17, 0
      %p91 = por %p89, %p90
      %p92 = scmp.le.s32.totalorder 1, %s11
      %p93 = scmp.lt.s32.totalorder %s11, 5
      %p94 = pnand %p92, %p93
      %p95 = pneg %p94
      // Predicated region
      $region9: #{tpu_custom_call.1} parent=5 // pred_check
        _
      $region10: #{tpu_custom_call.1} parent=5 // pred_check_branch
        %97 = sbr.rel (%p94) target = $region12
      $region11: #{tpu_custom_call.1} parent=5 // pred_region
        %s98 = ssub.s32 %s11, 1
        // Predicated region
        $region13: #{tpu_custom_call.1} parent=11 // pred_check
          %p99 = pneg %p58
        $region14: #{tpu_custom_call.1} parent=11 // pred_check_branch
          %101 = sbr.rel (%p99) target = $region16
        $region15: #{tpu_custom_call.1} parent=11 // pred_region
          _
        $region16: #{tpu_custom_call.1} parent=11 // pred_fallthru
          _
      $region12: #{tpu_custom_call.1} parent=5 // pred_fallthru
        _
      %p102 = scmp.lt.s32.totalorder %s11, 4
      // Predicated region
      $region17: #{tpu_custom_call.1} parent=5 // pred_check
        %p103 = pneg %p102
      $region18: #{tpu_custom_call.1} parent=5 // pred_check_branch
        %105 = sbr.rel (%p103) target = $region20
      $region19: #{tpu_custom_call.1} parent=5 // pred_region
        // Predicated region
        $region21: #{tpu_custom_call.1} parent=19 // pred_check
          %p106 = pneg %p31
        $region22: #{tpu_custom_call.1} parent=19 // pred_check_branch
          %108 = sbr.rel (%p106) target = $region24
        $region23: #{tpu_custom_call.1} parent=19 // pred_region
          %s109 = smul.u32 8, %s11
          %p110 = scmp.lt.s32.totalorder %s109, 31
          %s111 = scalar_select %p110, %s109, 31
          %s112 = smul.addr %s111, 8
          %s113 = scalar_lea.vmem %s0, %s112
          %s114 = smul.u32 8, %s11
        $region24: #{tpu_custom_call.1} parent=19 // pred_fallthru
          _
      $region20: #{tpu_custom_call.1} parent=5 // pred_fallthru
        _
      %p115 = scmp.le.s32.totalorder 1, %s11
      %p116 = scmp.lt.s32.totalorder %s11, 5
      %p117 = pnand %p115, %p116
      %p118 = pneg %p117
      // Predicated region
      $region25: #{tpu_custom_call.1} parent=5 // pred_check
        _
      $region26: #{tpu_custom_call.1} parent=5 // pred_check_branch
        %120 = sbr.rel (%p117) target = $region28
      $region27: #{tpu_custom_call.1} parent=5 // pred_region
        %s121 = ssub.s32 %s11, 1
        %s122 = smul.u32 8, %s16
        %p123 = scmp.lt.s32.totalorder %s122, 31
        %s124 = scalar_select %p123, %s122, 31
        %s125 = smul.addr %s124, 8
        %s126 = scalar_lea.vmem %s0, %s125
        %p127 = pneg %p37
        %p128 = pneg %p34
        %p129 = pneg %p58
        %p130 = pneg %p55
        %p131 = pneg %p84
        %p132 = pneg %p81
        %s133 = sand.u32 %s71, 1
        %s134 = scalar_lea.sflag [#allocation3], %s133
        %s135 = sand.u32 %s71, 1
        %s136 = smul.addr %s135, 32
        %s137 = scalar_lea.vmem [#allocation2], %s136
        %s138 = smul.u32 8, %s16
        %p139 = scmp.lt.s32.totalorder %s138, 31
        %s140 = scalar_select %p139, %s138, 31
        %s141 = smul.addr %s140, 8
        %s142 = scalar_lea.vmem %s0, %s141
        %s143 = smul.u32 8, %s16
        %s144 = smul.u32 8, %s16
        %v146 = vld [vmem:[%s142] sm:$0xff]
        %v147 = vld [vmem:[%s142 + $0x8] sm:$0xff]
        %v148 = vld [vmem:[%s142 + $0x10] sm:$0xff]
        %v149 = vld [vmem:[%s142 + $0x18] sm:$0xff]
        %v150 = vld [vmem:[%s142 + $0x20] sm:$0xff]
        %v151 = vld [vmem:[%s142 + $0x28] sm:$0xff]
        %v152 = vld [vmem:[%s142 + $0x30] sm:$0xff]
        %v153 = vld [vmem:[%s142 + $0x38] sm:$0xff]
        %v154 = vpack.c.bf16 %v147, %v146
        %v155 = vpack.c.bf16 %v149, %v148
        %v156 = vpack.c.bf16 %v151, %v150
        %v157 = vpack.c.bf16 %v153, %v152
        %v158 = vld [vmem:[%s1] sm:$0xf]
        %v159 = vld [vmem:[%s1 + $0x4] sm:$0xf]
        %v160 = vld [vmem:[%s1 + $0x8] sm:$0xf]
        %v161 = vld [vmem:[%s1 + $0xc] sm:$0xf]
        %v166 = vunpack.c.l.b16 %v158
        %v167 = vunpack.c.l.b16 %v159
        %v168 = vunpack.c.l.b16 %v160
        %v169 = vunpack.c.l.b16 %v161
        %v170 = vpack.c.b16 %v167, %v166
        %v171 = vpack.c.b16 %v169, %v168
        %vm174 = vcmask 261120
        %v176 = vsel %vm174, %v154, 0
        %v179 = vsel %vm174, %v155, 0
        %v182 = vsel %vm174, %v156, 0
        %v185 = vsel %vm174, %v157, 0
        %187 = vmatprep.subr.bf16.mxu0 0
        %188 = vmatpush1.bf16.msra.mxu0 0
        %189 = vmatprep.subr.bf16.mxu0 0
        %190 = vmatpush1.bf16.msra.mxu0 0
        %191 = vmatprep.subr.bf16.mxu0 0
        %192 = vmatpush1.bf16.msra.mxu0 0
        %193 = vmatprep.subr.bf16.mxu0 0
        %194 = vmatpush1.bf16.msra.mxu0 0
        %195 = vmatprep.subr.bf16.mxu0 0
        %196 = vmatpush1.bf16.msra.mxu0 0
        %197 = vmatprep.subr.bf16.mxu0 0
        %198 = vmatpush1.bf16.msra.mxu0 0
        %199 = vmatprep.subr.bf16.mxu0 0
        %200 = vmatpush1.bf16.msra.mxu0 %v171
        %201 = vmatprep.subr.bf16.mxu0 0
        %202 = vmatpush1.bf16.msra.mxu0 %v170
        %203 = vmatprep.subr.bf16.mxu0 0
        %204 = vmatpush2.bf16.msra.mxu0 0
        %205 = vmatprep.subr.bf16.mxu0 0
        %206 = vmatpush2.bf16.msra.mxu0 0
        %207 = vmatprep.subr.bf16.mxu0 0
        %208 = vmatpush2.bf16.msra.mxu0 0
        %209 = vmatprep.subr.bf16.mxu0 0
        %210 = vmatpush2.bf16.msra.mxu0 0
        %211 = vmatprep.subr.bf16.mxu0 0
        %212 = vmatpush2.bf16.msra.mxu0 0
        %213 = vmatprep.subr.bf16.mxu0 0
        %214 = vmatpush2.bf16.msra.mxu0 0
        %215 = vmatprep.subr.bf16.mxu0 0
        %216 = vmatpush2.bf16.msra.mxu0 0
        %217 = vmatprep.subr.bf16.mxu0 0
        %218 = vmatpush2.bf16.msra.mxu0 0
        %219 = vmatprep.mubr.bf16.mxu0 0
        %220 = vmatmul.mubr.bf16.gmra.mxu0 %v176
        %v221 = vpop.f32.mrf.mxu0
        %v222 = vadd.f32 0.0, %v221
        %v223 = vpop.f32.mrf.mxu0
        %v224 = vpop.f32.mrf.mxu0
        %v225 = vadd.f32 0.0, %v224
        %v226 = vpop.f32.mrf.mxu0
        %227 = vmatprep.mubr.bf16.mxu0 0
        %228 = vmatmul.mubr.bf16.gmra.mxu0 %v179
        %v229 = vpop.f32.mrf.mxu0
        %v230 = vadd.f32 0.0, %v229
        %v231 = vpop.f32.mrf.mxu0
        %v232 = vpop.f32.mrf.mxu0
        %v233 = vadd.f32 0.0, %v232
        %v234 = vpop.f32.mrf.mxu0
        %235 = vmatprep.mubr.bf16.mxu0 0
        %236 = vmatmul.mubr.bf16.gmra.mxu0 %v182
        %v237 = vpop.f32.mrf.mxu0
        %v238 = vadd.f32 0.0, %v237
        %v239 = vpop.f32.mrf.mxu0
        %v240 = vpop.f32.mrf.mxu0
        %v241 = vadd.f32 0.0, %v240
        %v242 = vpop.f32.mrf.mxu0
        %243 = vmatprep.mubr.bf16.mxu0 0
        %244 = vmatmul.mubr.bf16.gmra.mxu0 %v185
        %v245 = vpop.f32.mrf.mxu0
        %v246 = vadd.f32 0.0, %v245
        %v247 = vpop.f32.mrf.mxu0
        %v248 = vpop.f32.mrf.mxu0
        %v249 = vadd.f32 0.0, %v248
        %v250 = vpop.f32.mrf.mxu0
        %251 = vdwg.mxu0
        %v252 = vmax.f32 %v222, 0.0
        %v253 = vmax.f32 %v225, 0.0
        %v254 = vmax.f32 %v230, 0.0
        %v255 = vmax.f32 %v233, 0.0
        %v256 = vmax.f32 %v238, 0.0
        %v257 = vmax.f32 %v241, 0.0
        %v258 = vmax.f32 %v246, 0.0
        %v259 = vmax.f32 %v249, 0.0
        %v260 = vpack.c.bf16 %v253, %v252
        %v261 = vpack.c.bf16 %v255, %v254
        %v262 = vpack.c.bf16 %v257, %v256
        %v263 = vpack.c.bf16 %v259, %v258
        %v268 = vunpack.c.l.b16 %v260
        %v269 = vunpack.c.h.b16 %v260
        %v270 = vunpack.c.l.b16 %v261
        %v271 = vunpack.c.h.b16 %v261
        %v272 = vunpack.c.l.b16 %v262
        %v273 = vunpack.c.h.b16 %v262
        %v274 = vunpack.c.l.b16 %v263
        %v275 = vunpack.c.h.b16 %v263
        %v276 = vpack.c.b16 %v268, %v268
        %v277 = vpack.c.b16 %v269, %v269
        %v278 = vpack.c.b16 %v270, %v270
        %v279 = vpack.c.b16 %v271, %v271
        %v280 = vpack.c.b16 %v272, %v272
        %v281 = vpack.c.b16 %v273, %v273
        %v282 = vpack.c.b16 %v274, %v274
        %v283 = vpack.c.b16 %v275, %v275
        %292 = vst [vmem:[%s137] sm:$0xf] %v276
        %293 = vst [vmem:[%s137 + $0x4] sm:$0xf] %v277
        %294 = vst [vmem:[%s137 + $0x8] sm:$0xf] %v278
        %295 = vst [vmem:[%s137 + $0xc] sm:$0xf] %v279
        %296 = vst [vmem:[%s137 + $0x10] sm:$0xf] %v280
        %297 = vst [vmem:[%s137 + $0x14] sm:$0xf] %v281
        %298 = vst [vmem:[%s137 + $0x18] sm:$0xf] %v282
        %299 = vst [vmem:[%s137 + $0x1c] sm:$0xf] %v283
        %s300 = sand.u32 %s71, 1
        %s301 = scalar_lea.sflag [#allocation3], %s300
        %s302 = sand.u32 %s71, 1
        %s303 = smul.addr %s302, 32
        %s304 = scalar_lea.vmem [#allocation2], %s303
        // Predicated region
        $region29: #{tpu_custom_call.1} parent=27 // pred_check
          %p305 = pneg %p81
        $region30: #{tpu_custom_call.1} parent=27 // pred_check_branch
          %307 = sbr.rel (%p305) target = $region32
        $region31: #{tpu_custom_call.1} parent=27 // pred_region
          %s308 = smul.u32 8, %s16
          %s310 = ssub.s32 512, 512
          %311 = vsyncadd %s301, %s310
          %s312 = smul.addr %s308, 64
          %s313 = scalar_lea.hbm %s2, %s312
          %s314 = sshll.u32 %s304, 4
          %s315 = int_to_ptr.vmem [resolvable:$true] %s314
          %320 = dma.vmem_to_hbm [thread:$0]  %s315, 512, %s313, %s301, 64, 64, 4
        $region32: #{tpu_custom_call.1} parent=27 // pred_fallthru
          _
      $region28: #{tpu_custom_call.1} parent=5 // pred_fallthru
        _
      %p321 = scmp.le.s32.totalorder 2, %s11
      // Predicated region
      $region33: #{tpu_custom_call.1} parent=5 // pred_check
        %p322 = pneg %p321
      $region34: #{tpu_custom_call.1} parent=5 // pred_check_branch
        %324 = sbr.rel (%p322) target = $region36
      $region35: #{tpu_custom_call.1} parent=5 // pred_region
        %s325 = ssub.s32 %s11, 2
        // Predicated region
        $region37: #{tpu_custom_call.1} parent=35 // pred_check
          %p326 = pneg %p87
        $region38: #{tpu_custom_call.1} parent=35 // pred_check_branch
          %328 = sbr.rel (%p326) target = $region40
        $region39: #{tpu_custom_call.1} parent=35 // pred_region
          %s329 = sand.u32 %s72, 1
          %s330 = scalar_lea.sflag [#allocation3], %s329
          %s331 = sand.u32 %s72, 1
          %s332 = smul.addr %s331, 32
          %s333 = scalar_lea.vmem [#allocation2], %s332
          %334 = dma.done %s330, 512
        $region40: #{tpu_custom_call.1} parent=35 // pred_fallthru
          _
      $region36: #{tpu_custom_call.1} parent=5 // pred_fallthru
        _
    $region6: #{tpu_custom_call.1} parent=1 // loop_footer
      %s15 = sadd.s32 1, %s11
    $region7: #{tpu_custom_call.1} parent=1 // loop_footer_branch
      %10 = sbr.rel target = $region3
    $region8: #{tpu_custom_call.1} parent=1 // loop_exit
      _
    %335 = vsyncpa [#allocation3], 1
    %s336 = scalar_lea.sflag [#allocation3], 1
    %337 = vsyncpa %s336, 1

</llo_original>
